<compile_context>
chip_gen: v6e
topology: v6e:2x2x1
jax: 0.10.0
libtpu: 0.0.40
codegen_flags: <defaults>
</compile_context>

<pallas_src>
import jax
import jax.numpy as jnp
from jax.experimental import pallas as pl
from jax.experimental.pallas import tpu as pltpu

# Logical dimensions of the module.
IN_F, H1, H2, OUT_F = 2, 4, 4, 1

LANES = 128                    # lane width; batch is laid out (rows, 128)

# Flat SMEM parameter-vector layout (f32 scalars).
W1_OFF = 0                     # w1[i, j] -> W1_OFF + i*H1 + j   (8)
B1_OFF = W1_OFF + IN_F * H1    # b1[j]                           (4)
W2_OFF = B1_OFF + H1           # w2[k, j] -> W2_OFF + k*H2 + j   (16)
B2_OFF = W2_OFF + H1 * H2      # b2[j]                           (4)
W3_OFF = B2_OFF + H2           # w3[k, 0] -> W3_OFF + k          (4)
B3_OFF = W3_OFF + H2           # b3[0]                           (1)
N_PARAMS = B3_OFF + OUT_F      # 37

MAX_TR = 512                   # max 128-wide batch rows per grid step
                               # (= 65536 examples; ~1.5 MiB double-buffered)


def _round_up(n, m):
    return ((n + m - 1) // m) * m


def init_params(key):
    """Deterministic init mimicking nn.Linear (stored as (in, out))."""
    k1, k2, k3, k4, k5, k6 = jax.random.split(key, 6)

    def u(k, shape, fan_in):
        lim = 1.0 / jnp.sqrt(float(fan_in))
        return jax.random.uniform(k, shape, jnp.float32, -lim, lim)

    return {
        "w1": u(k1, (IN_F, H1), IN_F),
        "b1": u(k2, (H1,), IN_F),
        "w2": u(k3, (H1, H2), H1),
        "b2": u(k4, (H2,), H1),
        "w3": u(k5, (H2, OUT_F), H2),
        "b3": u(k6, (OUT_F,), H2),
    }


def pack_params(params):
    """One-time packing: all weights + biases -> a flat (37,) f32 SMEM vector."""
    w = jnp.zeros((N_PARAMS,), jnp.float32)
    w = w.at[W1_OFF:W1_OFF + IN_F * H1].set(
        params["w1"].astype(jnp.float32).reshape(-1))
    w = w.at[B1_OFF:B1_OFF + H1].set(params["b1"].astype(jnp.float32))
    w = w.at[W2_OFF:W2_OFF + H1 * H2].set(
        params["w2"].astype(jnp.float32).reshape(-1))
    w = w.at[B2_OFF:B2_OFF + H2].set(params["b2"].astype(jnp.float32))
    w = w.at[W3_OFF:W3_OFF + H2].set(
        params["w3"].astype(jnp.float32).reshape(-1))
    w = w.at[B3_OFF:B3_OFF + OUT_F].set(params["b3"].astype(jnp.float32))
    return {"w_vec": w}


def _mlp_kernel(x_ref, w_ref, o_ref):
    """Fused forward on one batch tile, batch-in-lanes VPU formulation.

    x_ref: (2, TR, 128) VMEM  -- two dense feature planes.
    w_ref: (37,)        SMEM  -- all weights + biases as f32 scalars.
    o_ref: (TR, 128)    VMEM  -- lane-dense sigmoid output plane.
    """
    x0 = x_ref[0]                                    # (TR, 128)
    x1 = x_ref[1]

    # Layer 1: 2 -> 4, ReLU (scalar-broadcast FMAs on the VPU).
    h1 = []
    for j in range(H1):
        z = (w_ref[W1_OFF + 0 * H1 + j] * x0
             + w_ref[W1_OFF + 1 * H1 + j] * x1
             + w_ref[B1_OFF + j])
        h1.append(jnp.maximum(z, 0.0))

    # Layer 2: 4 -> 4, ReLU.
    h2 = []
    for j in range(H2):
        z = w_ref[W2_OFF + 0 * H2 + j] * h1[0] + w_ref[B2_OFF + j]
        for k in range(1, H1):
            z = z + w_ref[W2_OFF + k * H2 + j] * h1[k]
        h2.append(jnp.maximum(z, 0.0))

    # Layer 3: 4 -> 1, sigmoid applied only to the single real output plane.
    z = w_ref[W3_OFF + 0] * h2[0] + w_ref[B3_OFF]
    for k in range(1, H2):
        z = z + w_ref[W3_OFF + k] * h2[k]
    o_ref[...] = jax.nn.sigmoid(z)


def nn02_forward(x, packed):
    """x: (B, 2) float32.  packed: output of pack_params (call once)."""
    b = x.shape[0]
    assert x.shape[1] == IN_F

    rows = pl.cdiv(b, LANES)                 # 128-wide batch rows needed
    if rows <= 8:
        tr = rows                            # single tiny block (== full dim)
    else:
        # Large tiles (amortize per-step overhead) but >=2 grid steps so the
        # "parallel" axis can be split across v7x's two TensorCores.
        tr = min(MAX_TR, _round_up(pl.cdiv(rows, 2), 8))
    n_blocks = pl.cdiv(rows, tr)
    pad_rows = n_blocks * tr
    pad_b = pad_rows * LANES

    # Compact batch-in-lanes input: 2 feature planes of shape (pad_rows, 128).
    xt = jnp.zeros((IN_F, pad_b), jnp.float32)
    xt = xt.at[:, :b].set(x.astype(jnp.float32).T)
    xt = xt.reshape(IN_F, pad_rows, LANES)

    cost = pl.CostEstimate(
        flops=2 * pad_b * (IN_F * H1 + H1 * H2 + H2 * OUT_F),
        transcendentals=pad_b,
        bytes_accessed=4 * ((IN_F + OUT_F) * pad_b + N_PARAMS),
    )

    out_p = pl.pallas_call(
        _mlp_kernel,
        out_shape=jax.ShapeDtypeStruct((pad_rows, LANES), jnp.float32),
        grid=(n_blocks,),
        in_specs=[
            pl.BlockSpec((IN_F, tr, LANES), lambda i: (0, i, 0)),   # x planes
            pl.BlockSpec(memory_space=pltpu.MemorySpace.SMEM),      # params
        ],
        out_specs=pl.BlockSpec((tr, LANES), lambda i: (i, 0)),
        compiler_params=pltpu.CompilerParams(
            dimension_semantics=("parallel",)),
        cost_estimate=cost,
    )(xt, packed["w_vec"])

    # Example k lives at (k // 128, k % 128); flatten, slice, reshape.
    return out_p.reshape(pad_b)[:b].reshape(b, OUT_F)


def _reference(x, p):
    h1 = jnp.maximum(x @ p["w1"] + p["b1"], 0.0)
    h2 = jnp.maximum(h1 @ p["w2"] + p["b2"], 0.0)
    return jax.nn.sigmoid(h2 @ p["w3"] + p["b3"])


if __name__ == "__main__":
    key = jax.random.PRNGKey(0)
    params = init_params(key)
    packed = pack_params(params)        # pre-pack ONCE; reused on every call

    # XOR truth-table inputs, same as the PyTorch script.
    x = jnp.array([[0.0, 0.0], [0.0, 1.0], [1.0, 0.0], [1.0, 1.0]],
                  dtype=jnp.float32)

    fwd = jax.jit(nn02_forward)
    y = jax.block_until_ready(fwd(x, packed))

    y_ref = _reference(x, params)
    assert y.shape == (4, 1), y.shape
    assert jnp.allclose(y, y_ref, atol=1e-5), (y, y_ref)

    print("KERNEL_OK")
</pallas_src>

<mosaic_0001>
module attributes {stable_mosaic.version = 11 : i64} {
  func.func @_mlp_kernel(%arg0: i32, %arg1: memref<2x1x128xf32, #tpu.memory_space<vmem>>, %arg2: memref<37xf32, #tpu.memory_space<smem>>, %arg3: memref<1x128xf32, #tpu.memory_space<vmem>>) attributes {dimension_semantics = [#tpu.dimension_semantics<parallel>], iteration_bounds = array<i64: 1>, scalar_prefetch = 0 : i64, scratch_operands = 0 : i64, tpu.core_type = #tpu.core_type<tc>, window_params = [{transform_indices = @transform_0, window_bounds = array<i64: 2, 1, 128>}, {transform_indices = @transform_1, window_bounds = array<i64: 37>}, {transform_indices = @transform_2, window_bounds = array<i64: 1, 128>}]} {
    %c0 = arith.constant 0 : index
    %c0_0 = arith.constant 0 : index
    %c0_1 = arith.constant 0 : index
    %0 = vector.load %arg1[%c0, %c0_0, %c0_1] : memref<2x1x128xf32, #tpu.memory_space<vmem>>, vector<1x1x128xf32>
    %1 = vector.shape_cast %0 : vector<1x1x128xf32> to vector<1x128xf32>
    %c1 = arith.constant 1 : index
    %c0_2 = arith.constant 0 : index
    %c0_3 = arith.constant 0 : index
    %2 = vector.load %arg1[%c1, %c0_2, %c0_3] : memref<2x1x128xf32, #tpu.memory_space<vmem>>, vector<1x1x128xf32>
    %3 = vector.shape_cast %2 : vector<1x1x128xf32> to vector<1x128xf32>
    %c0_4 = arith.constant 0 : index
    %4 = memref.load %arg2[%c0_4] : memref<37xf32, #tpu.memory_space<smem>>
    %5 = vector.broadcast %4 : f32 to vector<1x128xf32>
    %6 = arith.mulf %5, %1 : vector<1x128xf32>
    %c4 = arith.constant 4 : index
    %7 = memref.load %arg2[%c4] : memref<37xf32, #tpu.memory_space<smem>>
    %8 = vector.broadcast %7 : f32 to vector<1x128xf32>
    %9 = arith.mulf %8, %3 : vector<1x128xf32>
    %10 = arith.addf %6, %9 : vector<1x128xf32>
    %c8 = arith.constant 8 : index
    %11 = memref.load %arg2[%c8] : memref<37xf32, #tpu.memory_space<smem>>
    %12 = vector.broadcast %11 : f32 to vector<1x128xf32>
    %13 = arith.addf %10, %12 : vector<1x128xf32>
    %cst = arith.constant 0.000000e+00 : f32
    %14 = vector.broadcast %cst : f32 to vector<1x128xf32>
    %15 = arith.maximumf %13, %14 : vector<1x128xf32>
    %c1_5 = arith.constant 1 : index
    %16 = memref.load %arg2[%c1_5] : memref<37xf32, #tpu.memory_space<smem>>
    %17 = vector.broadcast %16 : f32 to vector<1x128xf32>
    %18 = arith.mulf %17, %1 : vector<1x128xf32>
    %c5 = arith.constant 5 : index
    %19 = memref.load %arg2[%c5] : memref<37xf32, #tpu.memory_space<smem>>
    %20 = vector.broadcast %19 : f32 to vector<1x128xf32>
    %21 = arith.mulf %20, %3 : vector<1x128xf32>
    %22 = arith.addf %18, %21 : vector<1x128xf32>
    %c9 = arith.constant 9 : index
    %23 = memref.load %arg2[%c9] : memref<37xf32, #tpu.memory_space<smem>>
    %24 = vector.broadcast %23 : f32 to vector<1x128xf32>
    %25 = arith.addf %22, %24 : vector<1x128xf32>
    %cst_6 = arith.constant 0.000000e+00 : f32
    %26 = vector.broadcast %cst_6 : f32 to vector<1x128xf32>
    %27 = arith.maximumf %25, %26 : vector<1x128xf32>
    %c2 = arith.constant 2 : index
    %28 = memref.load %arg2[%c2] : memref<37xf32, #tpu.memory_space<smem>>
    %29 = vector.broadcast %28 : f32 to vector<1x128xf32>
    %30 = arith.mulf %29, %1 : vector<1x128xf32>
    %c6 = arith.constant 6 : index
    %31 = memref.load %arg2[%c6] : memref<37xf32, #tpu.memory_space<smem>>
    %32 = vector.broadcast %31 : f32 to vector<1x128xf32>
    %33 = arith.mulf %32, %3 : vector<1x128xf32>
    %34 = arith.addf %30, %33 : vector<1x128xf32>
    %c10 = arith.constant 10 : index
    %35 = memref.load %arg2[%c10] : memref<37xf32, #tpu.memory_space<smem>>
    %36 = vector.broadcast %35 : f32 to vector<1x128xf32>
    %37 = arith.addf %34, %36 : vector<1x128xf32>
    %cst_7 = arith.constant 0.000000e+00 : f32
    %38 = vector.broadcast %cst_7 : f32 to vector<1x128xf32>
    %39 = arith.maximumf %37, %38 : vector<1x128xf32>
    %c3 = arith.constant 3 : index
    %40 = memref.load %arg2[%c3] : memref<37xf32, #tpu.memory_space<smem>>
    %41 = vector.broadcast %40 : f32 to vector<1x128xf32>
    %42 = arith.mulf %41, %1 : vector<1x128xf32>
    %c7 = arith.constant 7 : index
    %43 = memref.load %arg2[%c7] : memref<37xf32, #tpu.memory_space<smem>>
    %44 = vector.broadcast %43 : f32 to vector<1x128xf32>
    %45 = arith.mulf %44, %3 : vector<1x128xf32>
    %46 = arith.addf %42, %45 : vector<1x128xf32>
    %c11 = arith.constant 11 : index
    %47 = memref.load %arg2[%c11] : memref<37xf32, #tpu.memory_space<smem>>
    %48 = vector.broadcast %47 : f32 to vector<1x128xf32>
    %49 = arith.addf %46, %48 : vector<1x128xf32>
    %cst_8 = arith.constant 0.000000e+00 : f32
    %50 = vector.broadcast %cst_8 : f32 to vector<1x128xf32>
    %51 = arith.maximumf %49, %50 : vector<1x128xf32>
    %c12 = arith.constant 12 : index
    %52 = memref.load %arg2[%c12] : memref<37xf32, #tpu.memory_space<smem>>
    %53 = vector.broadcast %52 : f32 to vector<1x128xf32>
    %54 = arith.mulf %53, %15 : vector<1x128xf32>
    %c28 = arith.constant 28 : index
    %55 = memref.load %arg2[%c28] : memref<37xf32, #tpu.memory_space<smem>>
    %56 = vector.broadcast %55 : f32 to vector<1x128xf32>
    %57 = arith.addf %54, %56 : vector<1x128xf32>
    %c16 = arith.constant 16 : index
    %58 = memref.load %arg2[%c16] : memref<37xf32, #tpu.memory_space<smem>>
    %59 = vector.broadcast %58 : f32 to vector<1x128xf32>
    %60 = arith.mulf %59, %27 : vector<1x128xf32>
    %61 = arith.addf %57, %60 : vector<1x128xf32>
    %c20 = arith.constant 20 : index
    %62 = memref.load %arg2[%c20] : memref<37xf32, #tpu.memory_space<smem>>
    %63 = vector.broadcast %62 : f32 to vector<1x128xf32>
    %64 = arith.mulf %63, %39 : vector<1x128xf32>
    %65 = arith.addf %61, %64 : vector<1x128xf32>
    %c24 = arith.constant 24 : index
    %66 = memref.load %arg2[%c24] : memref<37xf32, #tpu.memory_space<smem>>
    %67 = vector.broadcast %66 : f32 to vector<1x128xf32>
    %68 = arith.mulf %67, %51 : vector<1x128xf32>
    %69 = arith.addf %65, %68 : vector<1x128xf32>
    %cst_9 = arith.constant 0.000000e+00 : f32
    %70 = vector.broadcast %cst_9 : f32 to vector<1x128xf32>
    %71 = arith.maximumf %69, %70 : vector<1x128xf32>
    %c13 = arith.constant 13 : index
    %72 = memref.load %arg2[%c13] : memref<37xf32, #tpu.memory_space<smem>>
    %73 = vector.broadcast %72 : f32 to vector<1x128xf32>
    %74 = arith.mulf %73, %15 : vector<1x128xf32>
    %c29 = arith.constant 29 : index
    %75 = memref.load %arg2[%c29] : memref<37xf32, #tpu.memory_space<smem>>
    %76 = vector.broadcast %75 : f32 to vector<1x128xf32>
    %77 = arith.addf %74, %76 : vector<1x128xf32>
    %c17 = arith.constant 17 : index
    %78 = memref.load %arg2[%c17] : memref<37xf32, #tpu.memory_space<smem>>
    %79 = vector.broadcast %78 : f32 to vector<1x128xf32>
    %80 = arith.mulf %79, %27 : vector<1x128xf32>
    %81 = arith.addf %77, %80 : vector<1x128xf32>
    %c21 = arith.constant 21 : index
    %82 = memref.load %arg2[%c21] : memref<37xf32, #tpu.memory_space<smem>>
    %83 = vector.broadcast %82 : f32 to vector<1x128xf32>
    %84 = arith.mulf %83, %39 : vector<1x128xf32>
    %85 = arith.addf %81, %84 : vector<1x128xf32>
    %c25 = arith.constant 25 : index
    %86 = memref.load %arg2[%c25] : memref<37xf32, #tpu.memory_space<smem>>
    %87 = vector.broadcast %86 : f32 to vector<1x128xf32>
    %88 = arith.mulf %87, %51 : vector<1x128xf32>
    %89 = arith.addf %85, %88 : vector<1x128xf32>
    %cst_10 = arith.constant 0.000000e+00 : f32
    %90 = vector.broadcast %cst_10 : f32 to vector<1x128xf32>
    %91 = arith.maximumf %89, %90 : vector<1x128xf32>
    %c14 = arith.constant 14 : index
    %92 = memref.load %arg2[%c14] : memref<37xf32, #tpu.memory_space<smem>>
    %93 = vector.broadcast %92 : f32 to vector<1x128xf32>
    %94 = arith.mulf %93, %15 : vector<1x128xf32>
    %c30 = arith.constant 30 : index
    %95 = memref.load %arg2[%c30] : memref<37xf32, #tpu.memory_space<smem>>
    %96 = vector.broadcast %95 : f32 to vector<1x128xf32>
    %97 = arith.addf %94, %96 : vector<1x128xf32>
    %c18 = arith.constant 18 : index
    %98 = memref.load %arg2[%c18] : memref<37xf32, #tpu.memory_space<smem>>
    %99 = vector.broadcast %98 : f32 to vector<1x128xf32>
    %100 = arith.mulf %99, %27 : vector<1x128xf32>
    %101 = arith.addf %97, %100 : vector<1x128xf32>
    %c22 = arith.constant 22 : index
    %102 = memref.load %arg2[%c22] : memref<37xf32, #tpu.memory_space<smem>>
    %103 = vector.broadcast %102 : f32 to vector<1x128xf32>
    %104 = arith.mulf %103, %39 : vector<1x128xf32>
    %105 = arith.addf %101, %104 : vector<1x128xf32>
    %c26 = arith.constant 26 : index
    %106 = memref.load %arg2[%c26] : memref<37xf32, #tpu.memory_space<smem>>
    %107 = vector.broadcast %106 : f32 to vector<1x128xf32>
    %108 = arith.mulf %107, %51 : vector<1x128xf32>
    %109 = arith.addf %105, %108 : vector<1x128xf32>
    %cst_11 = arith.constant 0.000000e+00 : f32
    %110 = vector.broadcast %cst_11 : f32 to vector<1x128xf32>
    %111 = arith.maximumf %109, %110 : vector<1x128xf32>
    %c15 = arith.constant 15 : index
    %112 = memref.load %arg2[%c15] : memref<37xf32, #tpu.memory_space<smem>>
    %113 = vector.broadcast %112 : f32 to vector<1x128xf32>
    %114 = arith.mulf %113, %15 : vector<1x128xf32>
    %c31 = arith.constant 31 : index
    %115 = memref.load %arg2[%c31] : memref<37xf32, #tpu.memory_space<smem>>
    %116 = vector.broadcast %115 : f32 to vector<1x128xf32>
    %117 = arith.addf %114, %116 : vector<1x128xf32>
    %c19 = arith.constant 19 : index
    %118 = memref.load %arg2[%c19] : memref<37xf32, #tpu.memory_space<smem>>
    %119 = vector.broadcast %118 : f32 to vector<1x128xf32>
    %120 = arith.mulf %119, %27 : vector<1x128xf32>
    %121 = arith.addf %117, %120 : vector<1x128xf32>
    %c23 = arith.constant 23 : index
    %122 = memref.load %arg2[%c23] : memref<37xf32, #tpu.memory_space<smem>>
    %123 = vector.broadcast %122 : f32 to vector<1x128xf32>
    %124 = arith.mulf %123, %39 : vector<1x128xf32>
    %125 = arith.addf %121, %124 : vector<1x128xf32>
    %c27 = arith.constant 27 : index
    %126 = memref.load %arg2[%c27] : memref<37xf32, #tpu.memory_space<smem>>
    %127 = vector.broadcast %126 : f32 to vector<1x128xf32>
    %128 = arith.mulf %127, %51 : vector<1x128xf32>
    %129 = arith.addf %125, %128 : vector<1x128xf32>
    %cst_12 = arith.constant 0.000000e+00 : f32
    %130 = vector.broadcast %cst_12 : f32 to vector<1x128xf32>
    %131 = arith.maximumf %129, %130 : vector<1x128xf32>
    %c32 = arith.constant 32 : index
    %132 = memref.load %arg2[%c32] : memref<37xf32, #tpu.memory_space<smem>>
    %133 = vector.broadcast %132 : f32 to vector<1x128xf32>
    %134 = arith.mulf %133, %71 : vector<1x128xf32>
    %c36 = arith.constant 36 : index
    %135 = memref.load %arg2[%c36] : memref<37xf32, #tpu.memory_space<smem>>
    %136 = vector.broadcast %135 : f32 to vector<1x128xf32>
    %137 = arith.addf %134, %136 : vector<1x128xf32>
    %c33 = arith.constant 33 : index
    %138 = memref.load %arg2[%c33] : memref<37xf32, #tpu.memory_space<smem>>
    %139 = vector.broadcast %138 : f32 to vector<1x128xf32>
    %140 = arith.mulf %139, %91 : vector<1x128xf32>
    %141 = arith.addf %137, %140 : vector<1x128xf32>
    %c34 = arith.constant 34 : index
    %142 = memref.load %arg2[%c34] : memref<37xf32, #tpu.memory_space<smem>>
    %143 = vector.broadcast %142 : f32 to vector<1x128xf32>
    %144 = arith.mulf %143, %111 : vector<1x128xf32>
    %145 = arith.addf %141, %144 : vector<1x128xf32>
    %c35 = arith.constant 35 : index
    %146 = memref.load %arg2[%c35] : memref<37xf32, #tpu.memory_space<smem>>
    %147 = vector.broadcast %146 : f32 to vector<1x128xf32>
    %148 = arith.mulf %147, %131 : vector<1x128xf32>
    %149 = arith.addf %145, %148 : vector<1x128xf32>
    %150 = arith.negf %149 : vector<1x128xf32>
    %151 = math.exp %150 : vector<1x128xf32>
    %cst_13 = arith.constant 1.000000e+00 : f32
    %152 = vector.broadcast %cst_13 : f32 to vector<1x128xf32>
    %153 = arith.addf %152, %151 : vector<1x128xf32>
    %154 = arith.divf %152, %153 : vector<1x128xf32>
    %c0_14 = arith.constant 0 : index
    %c0_15 = arith.constant 0 : index
    %155 = vector.load %arg3[%c0_14, %c0_15] : memref<1x128xf32, #tpu.memory_space<vmem>>, vector<1x128xf32>
    tpu.vector_store %arg3[%c0_14, %c0_15], %154 {strides = array<i32>} : memref<1x128xf32, #tpu.memory_space<vmem>>, vector<1x128xf32>,
    return
  }
  func.func @transform_0(%arg0: i32) -> (i32, i32, i32) {
    %c0_i32 = arith.constant 0 : i32
    %c0_i32_0 = arith.constant 0 : i32
    %c0_i32_1 = arith.constant 0 : i32
    return %c0_i32, %arg0, %c0_i32_0 : i32, i32, i32
  }
  func.func @transform_1(%arg0: i32) -> i32 {
    %c0_i32 = arith.constant 0 : i32
    %c0_i32_0 = arith.constant 0 : i32
    return %c0_i32 : i32
  }
  func.func @transform_2(%arg0: i32) -> (i32, i32) {
    %c0_i32 = arith.constant 0 : i32
    %c0_i32_0 = arith.constant 0 : i32
    return %arg0, %c0_i32 : i32, i32
  }
}

</mosaic_0001>

<llo_original>
// kernel: nn02_forward.1
$region0: #{nn02_forward.1}
  #allocation0 [shape = 'u32[]', space=smem, size = 0x4, offset = 0x4, fixed_abs, tag = 'smem constant byte address 0x4 - core index']
  #allocation1 [shape = 'u32[144,128]{1,0:T(1,128)}', space=vmem, size = 0x12000, scoped, tag = 'internal scratch']
  %s0 = inlined_call_operand.vmem [shape: f32[2,1,128], index: 0, kind: input, shape index: {}]
  %s1 = inlined_call_operand.vmem [shape: f32[37], index: 1, kind: input, shape index: {}]
  %s2 = inlined_call_operand.vmem [shape: f32[1,128], index: 2, kind: output, shape index: {}]
  %s3 = sld [smem:[#allocation0]]
  $region22: #{nn02_forward.1} parent=0
    _
  %s5 = ssub.s32 1, %s3
  %s6 = scalar_select 0, %s5, %s3
  $region1: #{nn02_forward.1} parent=0
    #allocation2 [shape = 'u8[512]{0}', space=smem, size = 0x200, scoped, tag = 'input window, operand 1, single buffered']
    #allocation3 [shape = 's32[1]{0}', space=sflag, size = 0x4, scoped, tag = 'scoped memory for nn02_forward.1']
    %7 = vsyncpa [#allocation3], 0
    // Predicated region
    $region2: #{nn02_forward.1} parent=1 // pred_check
      _
    $region3: #{nn02_forward.1} parent=1 // pred_check_branch
      %9 = sbr.rel (0) target = $region5
    $region4: #{nn02_forward.1} parent=1 // pred_region
      _
    $region5: #{nn02_forward.1} parent=1 // pred_fallthru
      _
    // Predicated region
    $region6: #{nn02_forward.1} parent=1 // pred_check
      _
    $region7: #{nn02_forward.1} parent=1 // pred_check_branch
      %11 = sbr.rel (0) target = $region9
    $region8: #{nn02_forward.1} parent=1 // pred_region
      %s13 = ssub.s32 16, 16
      %14 = vsyncadd [#allocation3], %s13
      %s16 = sshll.u32 %s1, 4
      %s17 = int_to_ptr.vmem [resolvable:$true] %s16
      %19 = dma.vmem_to_smem %s17, 16, [#allocation2], [#allocation3]
    $region9: #{nn02_forward.1} parent=1 // pred_fallthru
      _
    // Predicated region
    $region10: #{nn02_forward.1} parent=1 // pred_check
      _
    $region11: #{nn02_forward.1} parent=1 // pred_check_branch
      %21 = sbr.rel (0) target = $region13
    $region12: #{nn02_forward.1} parent=1 // pred_region
      %22 = dma.done [#allocation3], 16
    $region13: #{nn02_forward.1} parent=1 // pred_fallthru
      _
    %23 = sfence
    %v24 = vld [vmem:[%s0] sm:$0x1]
    %s25 = scalar_lea.vmem %s0, 1
    %v26 = vld [vmem:[%s25] sm:$0x1]
    %s27 = sld [smem:[#allocation2]]
    %v28 = vstv %s27
    %v29 = vmul.f32 %v28, %v24
    %s30 = sld [smem:[#allocation2 + $0x4]]
    %v31 = vstv %s30
    %v32 = vmul.f32 %v31, %v26
    %v33 = vadd.f32 %v29, %v32
    %s34 = sld [smem:[#allocation2 + $0x8]]
    %v35 = vstv %s34
    %v36 = vadd.f32 %v33, %v35
    %v37 = vmax.f32 %v36, 0.0
    %s38 = sld [smem:[#allocation2 + $0x1]]
    %v39 = vstv %s38
    %v40 = vmul.f32 %v39, %v24
    %s41 = sld [smem:[#allocation2 + $0x5]]
    %v42 = vstv %s41
    %v43 = vmul.f32 %v42, %v26
    %v44 = vadd.f32 %v40, %v43
    %s45 = sld [smem:[#allocation2 + $0x9]]
    %v46 = vstv %s45
    %v47 = vadd.f32 %v44, %v46
    %v48 = vmax.f32 %v47, 0.0
    %s49 = sld [smem:[#allocation2 + $0x2]]
    %v50 = vstv %s49
    %v51 = vmul.f32 %v50, %v24
    %s52 = sld [smem:[#allocation2 + $0x6]]
    %v53 = vstv %s52
    %v54 = vmul.f32 %v53, %v26
    %v55 = vadd.f32 %v51, %v54
    %s56 = sld [smem:[#allocation2 + $0xa]]
    %v57 = vstv %s56
    %v58 = vadd.f32 %v55, %v57
    %v59 = vmax.f32 %v58, 0.0
    %s60 = sld [smem:[#allocation2 + $0x3]]
    %v61 = vstv %s60
    %v62 = vmul.f32 %v61, %v24
    %s63 = sld [smem:[#allocation2 + $0x7]]
    %v64 = vstv %s63
    %v65 = vmul.f32 %v64, %v26
    %v66 = vadd.f32 %v62, %v65
    %s67 = sld [smem:[#allocation2 + $0xb]]
    %v68 = vstv %s67
    %v69 = vadd.f32 %v66, %v68
    %v70 = vmax.f32 %v69, 0.0
    %s71 = sld [smem:[#allocation2 + $0xc]]
    %v72 = vstv %s71
    %v73 = vmul.f32 %v72, %v37
    %s74 = sld [smem:[#allocation2 + $0x1c]]
    %v75 = vstv %s74
    %v76 = vadd.f32 %v73, %v75
    %s77 = sld [smem:[#allocation2 + $0x10]]
    %v78 = vstv %s77
    %v79 = vmul.f32 %v78, %v48
    %v80 = vadd.f32 %v76, %v79
    %s81 = sld [smem:[#allocation2 + $0x14]]
    %v82 = vstv %s81
    %v83 = vmul.f32 %v82, %v59
    %v84 = vadd.f32 %v80, %v83
    %s85 = sld [smem:[#allocation2 + $0x18]]
    %v86 = vstv %s85
    %v87 = vmul.f32 %v86, %v70
    %v88 = vadd.f32 %v84, %v87
    %v89 = vmax.f32 %v88, 0.0
    %s90 = sld [smem:[#allocation2 + $0xd]]
    %v91 = vstv %s90
    %v92 = vmul.f32 %v91, %v37
    %s93 = sld [smem:[#allocation2 + $0x1d]]
    %v94 = vstv %s93
    %v95 = vadd.f32 %v92, %v94
    %s96 = sld [smem:[#allocation2 + $0x11]]
    %v97 = vstv %s96
    %v98 = vmul.f32 %v97, %v48
    %v99 = vadd.f32 %v95, %v98
    %s100 = sld [smem:[#allocation2 + $0x15]]
    %v101 = vstv %s100
    %v102 = vmul.f32 %v101, %v59
    %v103 = vadd.f32 %v99, %v102
    %s104 = sld [smem:[#allocation2 + $0x19]]
    %v105 = vstv %s104
    %v106 = vmul.f32 %v105, %v70
    %v107 = vadd.f32 %v103, %v106
    %v108 = vmax.f32 %v107, 0.0
    %s109 = sld [smem:[#allocation2 + $0xe]]
    %v110 = vstv %s109
    %v111 = vmul.f32 %v110, %v37
    %s112 = sld [smem:[#allocation2 + $0x1e]]
    %v113 = vstv %s112
    %v114 = vadd.f32 %v111, %v113
    %s115 = sld [smem:[#allocation2 + $0x12]]
    %v116 = vstv %s115
    %v117 = vmul.f32 %v116, %v48
    %v118 = vadd.f32 %v114, %v117
    %s119 = sld [smem:[#allocation2 + $0x16]]
    %v120 = vstv %s119
    %v121 = vmul.f32 %v120, %v59
    %v122 = vadd.f32 %v118, %v121
    %s123 = sld [smem:[#allocation2 + $0x1a]]
    %v124 = vstv %s123
    %v125 = vmul.f32 %v124, %v70
    %v126 = vadd.f32 %v122, %v125
    %v127 = vmax.f32 %v126, 0.0
    %s128 = sld [smem:[#allocation2 + $0xf]]
    %v129 = vstv %s128
    %v130 = vmul.f32 %v129, %v37
    %s131 = sld [smem:[#allocation2 + $0x1f]]
    %v132 = vstv %s131
    %v133 = vadd.f32 %v130, %v132
    %s134 = sld [smem:[#allocation2 + $0x13]]
    %v135 = vstv %s134
    %v136 = vmul.f32 %v135, %v48
    %v137 = vadd.f32 %v133, %v136
    %s138 = sld [smem:[#allocation2 + $0x17]]
    %v139 = vstv %s138
    %v140 = vmul.f32 %v139, %v59
    %v141 = vadd.f32 %v137, %v140
    %s142 = sld [smem:[#allocation2 + $0x1b]]
    %v143 = vstv %s142
    %v144 = vmul.f32 %v143, %v70
    %v145 = vadd.f32 %v141, %v144
    %v146 = vmax.f32 %v145, 0.0
    %s147 = sld [smem:[#allocation2 + $0x20]]
    %v148 = vstv %s147
    %v149 = vmul.f32 %v148, %v89
    %s150 = sld [smem:[#allocation2 + $0x24]]
    %v151 = vstv %s150
    %v152 = vadd.f32 %v149, %v151
    %s153 = sld [smem:[#allocation2 + $0x21]]
    %v154 = vstv %s153
    %v155 = vmul.f32 %v154, %v108
    %v156 = vadd.f32 %v152, %v155
    %s157 = sld [smem:[#allocation2 + $0x22]]
    %v158 = vstv %s157
    %v159 = vmul.f32 %v158, %v127
    %v160 = vadd.f32 %v156, %v159
    %s161 = sld [smem:[#allocation2 + $0x23]]
    %v162 = vstv %s161
    %v163 = vmul.f32 %v162, %v146
    %v164 = vadd.f32 %v160, %v163
    %v165 = vxor.u32 %v164, 2147483648
    %v166 = vmul.f32 %v165, 1.442695
    %v167 = vpow.pop %v166
    %v168 = vadd.f32 %v167, 1.0
    %v169 = vrcp.pop %v168
    %v170 = vmul.f32 1.0, %v169
    %171 = vst [vmem:[%s2] sm:$0x1] %v170
    // Predicated region
    $region14: #{nn02_forward.1} parent=1 // pred_check
      _
    $region15: #{nn02_forward.1} parent=1 // pred_check_branch
      %173 = sbr.rel (0) target = $region17
    $region16: #{nn02_forward.1} parent=1 // pred_region
      _
    $region17: #{nn02_forward.1} parent=1 // pred_fallthru
      _
    // Predicated region
    $region18: #{nn02_forward.1} parent=1 // pred_check
      _
    $region19: #{nn02_forward.1} parent=1 // pred_check_branch
      %175 = sbr.rel (0) target = $region21
    $region20: #{nn02_forward.1} parent=1 // pred_region
      _
    $region21: #{nn02_forward.1} parent=1 // pred_fallthru
      _
    %176 = vsyncpa [#allocation3], 1

</llo_original>
